<compile_context>
chip_gen: v7x
topology: tpu7x:2x2x1
jax: 0.10.0
libtpu: 0.0.40
codegen_flags: <defaults>
</compile_context>

<pallas_src>
import functools

import jax
import jax.numpy as jnp
from jax.experimental import pallas as pl
from jax.experimental.pallas import tpu as pltpu


def _gem_kernel(p_ref, x_ref, o_ref, acc_ref, *, eps, hw, thw, needs_mask):
    # p_ref  : SMEM (1,) float32 exponent (whole array every grid step)
    # x_ref  : VMEM (tb, tc, thw) input chunk (original dtype)
    # o_ref  : VMEM (tb, tc) output tile (resident across the k axis)
    # acc_ref: VMEM (tb, tc) float32 spatial-sum accumulator
    k = pl.program_id(2)
    nk = pl.num_programs(2)

    @pl.when(k == 0)
    def _():
        acc_ref[...] = jnp.zeros_like(acc_ref)

    p = p_ref[0]

    x = x_ref[...].astype(jnp.float32)            # upcast inside kernel only
    x = jnp.maximum(x, jnp.float32(eps))          # clamp(min=eps) -> x > 0
    xp = jnp.exp(p * jnp.log(x))                  # x ** p (traced p, EUP)

    if needs_mask:                                # ragged spatial tail only
        valid = hw - k * thw                      # lanes still in-bounds
        lane = jax.lax.broadcasted_iota(jnp.int32, xp.shape, dimension=2)
        xp = jnp.where(lane < valid, xp, 0.0)

    acc_ref[...] += jnp.sum(xp, axis=-1)          # f32 accumulation (XLU)

    @pl.when(k == nk - 1)
    def _():
        inv_p = 1.0 / p                           # scalar epilogue exponent
        inv_hw = jnp.float32(1.0 / hw)            # compile-time constant
        m = acc_ref[...] * inv_hw                 # spatial mean, strictly > 0
        o_ref[...] = jnp.exp(jnp.log(m) * inv_p).astype(o_ref.dtype)  # m**(1/p)


def _pick_tiles(B, C, HW, itemsize, vmem_budget_bytes=6 * 1024 * 1024):
    """Pick (tb, tc, thw): divide evenly / obey (8,128) rule / fit VMEM."""
    # tc: sublane dim of the input block (%8 or ==C) AND lane dim of the
    # output block (%128 or ==C)  ->  multiple of 128, or full C.
    tc = 128 if C % 128 == 0 else C
    # tb: leading (unconstrained) dim of the input block, sublane dim of the
    # output block (%8 or ==B).
    tb = 8 if B % 8 == 0 else B

    def blk_bytes(tb_, tc_, thw_):
        return tb_ * tc_ * thw_ * itemsize

    if blk_bytes(tb, tc, HW) <= vmem_budget_bytes:
        thw = HW
        # Grow tiles while they still divide evenly and fit the per-buffer
        # budget (Pallas double-buffers each input, so real usage is ~2x).
        while B % (tb * 2) == 0 and blk_bytes(tb * 2, tc, HW) <= vmem_budget_bytes:
            tb *= 2
        while C % (tc * 2) == 0 and blk_bytes(tb, tc * 2, HW) <= vmem_budget_bytes:
            tc *= 2
    else:
        # Spatial dim too large for one resident block: chunk it on the lane
        # axis (must stay a multiple of 128 when not covering full HW).
        thw = max(128, (vmem_budget_bytes // (tb * tc * itemsize)) // 128 * 128)
        thw = min(thw, HW)
    return tb, tc, thw


def gem(x, p, eps=1e-6):
    """x: (B, C, H, W) NCHW. Returns (B, C) in x.dtype."""
    B, C, H, W = x.shape
    HW = H * W
    x3 = x.reshape(B, C, HW)                      # no dtype forcing
    p_arr = jnp.asarray(p, dtype=jnp.float32).reshape(1)

    tb, tc, thw = _pick_tiles(B, C, HW, x3.dtype.itemsize)
    grid = (B // tb, C // tc, pl.cdiv(HW, thw))
    needs_mask = (HW % thw) != 0

    return pl.pallas_call(
        functools.partial(_gem_kernel, eps=float(eps), hw=HW, thw=thw,
                          needs_mask=needs_mask),
        out_shape=jax.ShapeDtypeStruct((B, C), x.dtype),
        grid=grid,
        in_specs=[
            pl.BlockSpec(memory_space=pltpu.MemorySpace.SMEM),           # p
            pl.BlockSpec((tb, tc, thw), lambda i, j, k: (i, j, k)),      # x
        ],
        out_specs=pl.BlockSpec((tb, tc), lambda i, j, k: (i, j)),
        scratch_shapes=[pltpu.VMEM((tb, tc), jnp.float32)],
        compiler_params=pltpu.CompilerParams(
            dimension_semantics=("parallel", "parallel", "arbitrary")),
    )(p_arr, x3)


if __name__ == "__main__":
    key = jax.random.PRNGKey(0)
    B, C, H, W = 2, 4, 16, 16

    # Deterministic "parameter" init, mirroring nn.Parameter(torch.ones(1) * 3)
    p_param = jnp.ones((1,), dtype=jnp.float32) * 3.0
    eps = 1e-6

    x = jax.random.normal(key, (B, C, H, W), dtype=jnp.float32)

    out = gem(x, p_param, eps=eps)
    out = jax.block_until_ready(out)

    # Pure-JAX reference for sanity check.
    xr = jnp.maximum(x, eps)
    ref = jnp.mean(xr ** p_param[0], axis=(2, 3)) ** (1.0 / p_param[0])

    assert out.shape == (B, C)
    assert jnp.allclose(out, ref, rtol=1e-4, atol=1e-5), (out, ref)
    print("KERNEL_OK")
</pallas_src>

<mosaic_0001>
module attributes {stable_mosaic.version = 11 : i64} {
  func.func @_gem_kernel(%arg0: i32, %arg1: i32, %arg2: i32, %arg3: memref<1xf32, #tpu.memory_space<smem>>, %arg4: memref<2x4x256xf32, #tpu.memory_space<vmem>>, %arg5: memref<2x4xf32, #tpu.memory_space<vmem>>, %arg6: memref<2x4xf32, #tpu.memory_space<vmem>>) attributes {dimension_semantics = [#tpu.dimension_semantics<parallel>, #tpu.dimension_semantics<parallel>, #tpu.dimension_semantics<arbitrary>], iteration_bounds = array<i64: 1, 1, 1>, scalar_prefetch = 0 : i64, scratch_operands = 1 : i64, tpu.core_type = #tpu.core_type<tc>, window_params = [{transform_indices = @transform_0, window_bounds = array<i64: 1>}, {transform_indices = @transform_1, window_bounds = array<i64: 2, 4, 256>}, {transform_indices = @transform_2, window_bounds = array<i64: 2, 4>}]} {
    %c0_i32 = arith.constant 0 : i32
    %0 = arith.cmpi eq, %arg2, %c0_i32 : i32
    %1 = arith.extui %0 : i1 to i32
    %c0_i32_0 = arith.constant 0 : i32
    %2 = arith.cmpi ne, %1, %c0_i32_0 : i32
    scf.if %2 {
      %cst_11 = arith.constant 0.000000e+00 : f32
      %18 = vector.broadcast %cst_11 : f32 to vector<2x4xf32>
      %c0_12 = arith.constant 0 : index
      %c0_13 = arith.constant 0 : index
      %19 = vector.load %arg6[%c0_12, %c0_13] : memref<2x4xf32, #tpu.memory_space<vmem>>, vector<2x4xf32>
      tpu.vector_store %arg6[%c0_12, %c0_13], %18 {strides = array<i32>} : memref<2x4xf32, #tpu.memory_space<vmem>>, vector<2x4xf32>,
    } else {
    }
    %c0 = arith.constant 0 : index
    %3 = memref.load %arg3[%c0] : memref<1xf32, #tpu.memory_space<smem>>
    %c0_1 = arith.constant 0 : index
    %c0_2 = arith.constant 0 : index
    %c0_3 = arith.constant 0 : index
    %4 = vector.load %arg4[%c0_1, %c0_2, %c0_3] : memref<2x4x256xf32, #tpu.memory_space<vmem>>, vector<2x4x256xf32>
    %cst = arith.constant 9.99999997E-7 : f32
    %5 = vector.broadcast %cst : f32 to vector<2x4x256xf32>
    %6 = arith.maximumf %4, %5 : vector<2x4x256xf32>
    %7 = math.log %6 : vector<2x4x256xf32>
    %8 = vector.broadcast %3 : f32 to vector<2x4x256xf32>
    %9 = arith.mulf %8, %7 : vector<2x4x256xf32>
    %10 = math.exp %9 : vector<2x4x256xf32>
    %c0_4 = arith.constant 0 : index
    %c0_5 = arith.constant 0 : index
    %11 = vector.load %arg6[%c0_4, %c0_5] : memref<2x4xf32, #tpu.memory_space<vmem>>, vector<2x4xf32>
    %cst_6 = arith.constant dense<0.000000e+00> : vector<2x4xf32>
    %12 = vector.multi_reduction <add>, %10, %cst_6 [2] : vector<2x4x256xf32> to vector<2x4xf32>
    %13 = arith.addf %11, %12 : vector<2x4xf32>
    %c0_7 = arith.constant 0 : index
    %c0_8 = arith.constant 0 : index
    %14 = vector.load %arg6[%c0_7, %c0_8] : memref<2x4xf32, #tpu.memory_space<vmem>>, vector<2x4xf32>
    tpu.vector_store %arg6[%c0_7, %c0_8], %13 {strides = array<i32>} : memref<2x4xf32, #tpu.memory_space<vmem>>, vector<2x4xf32>,
    %c0_i32_9 = arith.constant 0 : i32
    %15 = arith.cmpi eq, %arg2, %c0_i32_9 : i32
    %16 = arith.extui %15 : i1 to i32
    %c0_i32_10 = arith.constant 0 : i32
    %17 = arith.cmpi ne, %16, %c0_i32_10 : i32
    scf.if %17 {
      %cst_11 = arith.constant 1.000000e+00 : f32
      %18 = arith.divf %cst_11, %3 : f32
      %c0_12 = arith.constant 0 : index
      %c0_13 = arith.constant 0 : index
      %19 = vector.load %arg6[%c0_12, %c0_13] : memref<2x4xf32, #tpu.memory_space<vmem>>, vector<2x4xf32>
      %cst_14 = arith.constant 3.906250e-03 : f32
      %20 = vector.broadcast %cst_14 : f32 to vector<2x4xf32>
      %21 = arith.mulf %19, %20 : vector<2x4xf32>
      %22 = math.log %21 : vector<2x4xf32>
      %23 = vector.broadcast %18 : f32 to vector<2x4xf32>
      %24 = arith.mulf %22, %23 : vector<2x4xf32>
      %25 = math.exp %24 : vector<2x4xf32>
      %c0_15 = arith.constant 0 : index
      %c0_16 = arith.constant 0 : index
      %26 = vector.load %arg5[%c0_15, %c0_16] : memref<2x4xf32, #tpu.memory_space<vmem>>, vector<2x4xf32>
      tpu.vector_store %arg5[%c0_15, %c0_16], %25 {strides = array<i32>} : memref<2x4xf32, #tpu.memory_space<vmem>>, vector<2x4xf32>,
    } else {
    }
    return
  }
  func.func @transform_0(%arg0: i32, %arg1: i32, %arg2: i32) -> i32 {
    %c0_i32 = arith.constant 0 : i32
    %c0_i32_0 = arith.constant 0 : i32
    return %c0_i32 : i32
  }
  func.func @transform_1(%arg0: i32, %arg1: i32, %arg2: i32) -> (i32, i32, i32) {
    %c0_i32 = arith.constant 0 : i32
    return %arg0, %arg1, %arg2 : i32, i32, i32
  }
  func.func @transform_2(%arg0: i32, %arg1: i32, %arg2: i32) -> (i32, i32) {
    %c0_i32 = arith.constant 0 : i32
    return %arg0, %arg1 : i32, i32
  }
}

</mosaic_0001>

<llo_original>
// kernel: tpu_custom_call.1
$region0: #{tpu_custom_call.1}
  #allocation0 [shape = 'u32[]', space=smem, size = 0x4, offset = 0x4, fixed_abs, tag = 'smem constant byte address 0x4 - core index']
  #allocation1 [shape = 'u32[144,128]{1,0:T(1,128)}', space=vmem, size = 0x12000, scoped, tag = 'internal scratch']
  #allocation2 [shape = 'f32[2,4]{1,0:T(2,128)}', space=vmem, size = 0x400, scoped, tag = 'scratch operand']
  #allocation3 [shape = 'f32[1]{0:T(128)S(6)}', space=smem, size = 0x200, scoped, tag = 'scoped memory for tpu_custom_call.1']
  %s0 = inlined_call_operand.<no memory space> [shape: f32[1], index: 0, kind: input, shape index: {}]
  %s1 = inlined_call_operand.hbm [shape: f32[2,4,256], index: 1, kind: input, shape index: {}]
  %s2 = inlined_call_operand.hbm [shape: f32[2,4], index: 2, kind: output, shape index: {}]
  %s3 = sld [smem:[#allocation0]]
  $region30: #{tpu_custom_call.1} parent=0
    _
  %s5 = ssub.s32 1, %s3
  %s6 = scalar_select 0, %s5, %s3
  %7 = sst [smem:[#allocation3]] %s0
  $region1: #{tpu_custom_call.1} parent=0
    #allocation4 [shape = 'u8[8192]{0}', space=vmem, size = 0x2000, scoped, tag = 'input window, operand 1, single buffered']
    #allocation5 [shape = 's32[1]{0}', space=sflag, size = 0x4, scoped, tag = 'scoped memory for tpu_custom_call.1']
    #allocation6 [shape = 's32[1]{0}', space=sflag, size = 0x4, scoped, tag = 'scoped memory for tpu_custom_call.1']
    #allocation7 [shape = 'u8[1024]{0}', space=vmem, size = 0x400, scoped, tag = 'output window, operand 0, single buffered']
    %8 = vsyncpa [#allocation5], 0
    %9 = vsyncpa [#allocation6], 0
    // Predicated region
    $region2: #{tpu_custom_call.1} parent=1 // pred_check
      _
    $region3: #{tpu_custom_call.1} parent=1 // pred_check_branch
      %11 = sbr.rel (0) target = $region5
    $region4: #{tpu_custom_call.1} parent=1 // pred_region
      _
    $region5: #{tpu_custom_call.1} parent=1 // pred_fallthru
      _
    // Predicated region
    $region6: #{tpu_custom_call.1} parent=1 // pred_check
      _
    $region7: #{tpu_custom_call.1} parent=1 // pred_check_branch
      %13 = sbr.rel (0) target = $region9
    $region8: #{tpu_custom_call.1} parent=1 // pred_region
      %s15 = ssub.s32 256, 256
      %16 = vsyncadd [#allocation5], %s15
      %s17 = sshll.u32 [#allocation4], 4
      %s18 = int_to_ptr.vmem [resolvable:$true] %s17
      %23 = dma.hbm_to_vmem [thread:$0]  %s1, 256, %s18, [#allocation5], 128, 128, 8
    $region9: #{tpu_custom_call.1} parent=1 // pred_fallthru
      _
    // Predicated region
    $region10: #{tpu_custom_call.1} parent=1 // pred_check
      _
    $region11: #{tpu_custom_call.1} parent=1 // pred_check_branch
      %25 = sbr.rel (0) target = $region13
    $region12: #{tpu_custom_call.1} parent=1 // pred_region
      %26 = dma.done [#allocation5], 256
    $region13: #{tpu_custom_call.1} parent=1 // pred_fallthru
      _
    %p27 = scmp.eq.s32.totalorder 0, 0
    // Predicated region
    $region14: #{tpu_custom_call.1} parent=1 // pred_check
      %p28 = pneg %p27
    $region15: #{tpu_custom_call.1} parent=1 // pred_check_branch
      %30 = sbr.rel (%p28) target = $region17
    $region16: #{tpu_custom_call.1} parent=1 // pred_region
      %vm31 = vcmask 25600
      %32 = vst.msk [vmem:[#allocation2] sm:$0x3] %vm31, 0.0
    $region17: #{tpu_custom_call.1} parent=1 // pred_fallthru
      _
    %s33 = sld [smem:[#allocation3]]
    %v34 = vld [vmem:[#allocation4] sm:$0xff]
    %v35 = vld [vmem:[#allocation4 + $0x8] sm:$0xff]
    %v36 = vmax.f32 %v34, 1e-06
    %v37 = vmax.f32 %v35, 1e-06
    %v38 = vlog2.pop %v36
    %v39 = vmul.f32 %v38, 0.6931472
    %v40 = vlog2.pop %v37
    %v41 = vmul.f32 %v40, 0.6931472
    %v42 = vstv %s33
    %v43 = vmul.f32 %v42, %v39
    %v44 = vmul.f32 %v42, %v41
    %v45 = vmul.f32 %v43, 1.442695
    %v46 = vpow.pop %v45
    %v47 = vmul.f32 %v44, 1.442695
    %v48 = vpow.pop %v47
    %v49 = vld [vmem:[#allocation2] sm:$0x3]
    %v52 = vcombine.high %v46, %v46
    %v53 = vcombine.high %v48, %v48
    %vm56 = vcmask 1043456
    %v57 = vsel %vm56, %v46, 0.0
    %v58 = vsel %vm56, %v52, 0.0
    %v59 = vadd.f32 %v57, %v58
    %60 = vadd.xlane.f32.xlu0 %v59
    %v61 = vpop.xlane.xlu0 %60
    %v62 = vsel %vm56, %v48, 0.0
    %v63 = vsel %vm56, %v53, 0.0
    %v64 = vadd.f32 %v62, %v63
    %65 = vadd.xlane.f32.xlu0 %v64
    %v66 = vpop.xlane.xlu0 %65
    %v69 = vlaneseq
    %v70 = vand.u32 %v69, 127
    %v71 = vlaneseq
    %v72 = vshrl.u32 %v71, 7
    %v73 = vsub.s32 %v70, %v72
    %v74 = vrot.slane %v61, %v73
    %v75 = vlaneseq
    %v76 = vshrl.u32 %v75, 7
    %v77 = vsub.s32 %v70, %v76
    %v78 = vrot.slane %v66, %v77
    %vm79 = vcmask 1041409
    %v80 = vsel %vm79, %v78, %v74
    %v82 = vadd.f32 %v49, %v80
    %vm83 = vcmask 25600
    %84 = vst.msk [vmem:[#allocation2] sm:$0x3] %vm83, %v82
    // Predicated region
    $region18: #{tpu_custom_call.1} parent=1 // pred_check
      %p85 = pneg %p27
    $region19: #{tpu_custom_call.1} parent=1 // pred_check_branch
      %87 = sbr.rel (%p85) target = $region21
    $region20: #{tpu_custom_call.1} parent=1 // pred_region
      %v88 = vstv %s33
      %v89 = vrcp.pop %v88
      %s90 = vtos %v89
      %v91 = vld [vmem:[#allocation2] sm:$0x3]
      %v92 = vmul.f32 %v91, 0.00390625
      %v93 = vlog2.pop %v92
      %v94 = vmul.f32 %v93, 0.6931472
      %v95 = vstv %s90
      %v96 = vmul.f32 %v94, %v95
      %v97 = vmul.f32 %v96, 1.442695
      %v98 = vpow.pop %v97
      %99 = vst.msk [vmem:[#allocation7] sm:$0x3] %vm83, %v98
    $region21: #{tpu_custom_call.1} parent=1 // pred_fallthru
      _
    // Predicated region
    $region22: #{tpu_custom_call.1} parent=1 // pred_check
      _
    $region23: #{tpu_custom_call.1} parent=1 // pred_check_branch
      %101 = sbr.rel (0) target = $region25
    $region24: #{tpu_custom_call.1} parent=1 // pred_region
      %s103 = ssub.s32 32, 32
      %104 = vsyncadd [#allocation6], %s103
      %s106 = sshll.u32 [#allocation7], 4
      %s107 = int_to_ptr.vmem [resolvable:$true] %s106
      %109 = dma.vmem_to_hbm [thread:$0]  %s107, 32, %s2, [#allocation6]
    $region25: #{tpu_custom_call.1} parent=1 // pred_fallthru
      _
    // Predicated region
    $region26: #{tpu_custom_call.1} parent=1 // pred_check
      _
    $region27: #{tpu_custom_call.1} parent=1 // pred_check_branch
      %111 = sbr.rel (0) target = $region29
    $region28: #{tpu_custom_call.1} parent=1 // pred_region
      %112 = dma.done [#allocation6], 32
    $region29: #{tpu_custom_call.1} parent=1 // pred_fallthru
      _
    %113 = vsyncpa [#allocation5], 1
    %114 = vsyncpa [#allocation6], 1

</llo_original>
